<compile_context>
chip_gen: v7x
topology: tpu7x:2x2x1
jax: 0.10.0
libtpu: 0.0.40
codegen_flags: <defaults>
</compile_context>

<pallas_src>
import functools

import jax
import jax.numpy as jnp
import numpy as np
from jax import lax
from jax.experimental import pallas as pl
from jax.experimental.pallas import tpu as pltpu

EPS = 1e-5


# ---------------------------------------------------------------------------
# Pallas kernel: one token tile (tm rows) of the whole separator head.
# ---------------------------------------------------------------------------
def _separator_kernel(x_ref, scale_ref, shift_ref, ek_ref,
                      w1_ref, b1_ref, w2_ref, b2_ref, o_ref):
    x = x_ref[...]                                   # (tm, K*N) f32 token-major
    ek = ek_ref[...]                                 # (K, K*N) block-broadcast ones

    # GroupNorm(groups=1): per-(batch, subband) scale = rstd, shift = -mean*rstd
    # (f32, two-pass stats from the wrapper), expanded to lanes with a tiny
    # low-rank matmul.  The per-MLP affine (gamma/beta) is folded into fc_1.
    scale = jnp.dot(scale_ref[...], ek, preferred_element_type=jnp.float32)
    shift = jnp.dot(shift_ref[...], ek, preferred_element_type=jnp.float32)
    xn = x * scale + shift

    # fc_1 (1x1 conv == matmul; block-diagonal over all 2K MLPs) + tanh.
    # bf16 operands, f32 accumulation.
    h = jnp.tanh(jnp.dot(xn.astype(jnp.bfloat16), w1_ref[...],
                         preferred_element_type=jnp.float32) + b1_ref[...])

    # fc_2 (block-diagonal) -> GLU.  Columns: [all a-halves | all gate-halves];
    # both halves are 128-lane aligned, so the split and the store are
    # unmasked lane-dense.
    y = jnp.dot(h.astype(jnp.bfloat16), w2_ref[...],
                preferred_element_type=jnp.float32) + b2_ref[...]
    half = y.shape[-1] // 2
    o_ref[...] = y[:, :half] * jax.nn.sigmoid(y[:, half:])


# ---------------------------------------------------------------------------
# Wrapper: stats + layout, pallas_call over token tiles, gather glue.
# ---------------------------------------------------------------------------
@functools.partial(jax.jit, static_argnames=("tm",))
def separator_forward(x_bnkt, ek, w1_bd, b1_bd, w2_bd, b2_bd,
                      idx_mask, idx_res, *, tm):
    B, N, K, T = x_bnkt.shape
    BT, KN = B * T, K * N
    GH = w1_bd.shape[1]
    GCp = w2_bd.shape[1] // 2                         # padded to multiple of 128
    C, F, _ = idx_mask.shape
    assert tm % 8 == 0 and BT % tm == 0               # TODO(synk): ragged last tile

    # GroupNorm stats per (batch, subband), two-pass (matches nn.GroupNorm).
    xf = x_bnkt.astype(jnp.float32)
    mean = jnp.mean(xf, axis=(1, 3))                                   # (B, K)
    var = jnp.mean(jnp.square(xf - mean[:, None, :, None]), axis=(1, 3))
    rstd = lax.rsqrt(var + EPS)
    scale_rows = jnp.repeat(rstd, T, axis=0)                           # (BT, K)
    shift_rows = jnp.repeat(-mean * rstd, T, axis=0)                   # (BT, K)

    # Token-major activation layout (row = b*T + t, col = k*N + n).
    x_tok = jnp.transpose(xf, (0, 3, 2, 1)).reshape(BT, KN)

    n_tiles = BT // tm

    # Rough roofline / scheduler hints.
    flops = 2 * BT * (2 * K * KN + KN * GH + GH * 2 * GCp)
    transcendentals = BT * (GH + GCp)
    bytes_accessed = (4 * BT * (KN + 2 * K + GCp)          # x, scale, shift, out
                      + 2 * KN * GH + 2 * GH * 2 * GCp     # bf16 weights
                      + 4 * (GH + 2 * GCp) + 4 * K * KN)   # biases + expand op

    # Explicit VMEM budget (v7x has 64 MiB): resident weights + 2x buffered tiles.
    tile_bytes = 4 * tm * (KN + 2 * K + GCp)
    resident_bytes = (2 * KN * GH + 2 * GH * 2 * GCp
                      + 4 * (GH + 2 * GCp) + 4 * K * KN)
    vmem_limit = int(min(64 << 20, 2 * (tile_bytes + resident_bytes) + (4 << 20)))

    tok = lambda i: (i, 0)
    full = lambda i: (0, 0)
    out = pl.pallas_call(
        _separator_kernel,
        out_shape=jax.ShapeDtypeStruct((BT, GCp), jnp.float32),
        grid_spec=pltpu.PrefetchScalarGridSpec(
            num_scalar_prefetch=0,
            grid=(n_tiles,),                           # token tiles: parallel
            in_specs=[
                pl.BlockSpec((tm, KN), tok),           # x (token-major tile)
                pl.BlockSpec((tm, K), tok),            # GroupNorm scale rows (rstd)
                pl.BlockSpec((tm, K), tok),            # GroupNorm shift rows (-mean*rstd)
                pl.BlockSpec((K, KN), full),           # subband->lane expand operator
                pl.BlockSpec((KN, GH), full),          # fc_1 block-diag weight (bf16, affine folded)
                pl.BlockSpec((1, GH), full),           # fc_1 bias (beta folded, f32)
                pl.BlockSpec((GH, 2 * GCp), full),     # fc_2 block-diag weight (bf16)
                pl.BlockSpec((1, 2 * GCp), full),      # fc_2 bias (f32)
            ],
            out_specs=pl.BlockSpec((tm, GCp), tok),    # lane-dense (GCp % 128 == 0)
        ),
        compiler_params=pltpu.CompilerParams(
            dimension_semantics=("parallel",),         # disjoint tiles -> v7x TC sharding
            vmem_limit_bytes=vmem_limit),
        cost_estimate=pl.CostEstimate(
            flops=flops, transcendentals=transcendentals,
            bytes_accessed=bytes_accessed),
    )(x_tok, scale_rows, shift_rows, ek, w1_bd, b1_bd, w2_bd, b2_bd)

    # Glue: one precomputed gather per bank rebuilds (B, C, F, T, 2).
    out_bt = out.reshape(B, T, GCp)

    def gather(idx):
        g = jnp.take(out_bt, idx.reshape(-1), axis=2)           # (B, T, C*F*2)
        return jnp.transpose(g.reshape(B, T, C, F, 2), (0, 2, 3, 1, 4))

    return gather(idx_mask), gather(idx_res)


# ---------------------------------------------------------------------------
# Deterministic parameter construction (synthetic init, per-subband shapes).
# ---------------------------------------------------------------------------
def make_params(key, subbands, N, C):
    params = {"mask": [], "res": []}
    for bank in ("mask", "res"):
        for (s, e) in subbands:
            w = e - s
            cout = 2 * C * w                              # _MLP output_channels
            key, *ks = jax.random.split(key, 7)
            params[bank].append(dict(
                gamma=1.0 + 0.1 * jax.random.normal(ks[0], (N,), jnp.float32),
                beta=0.1 * jax.random.normal(ks[1], (N,), jnp.float32),
                w1=jax.random.normal(ks[2], (4 * N, N), jnp.float32) / np.sqrt(N),
                b1=0.1 * jax.random.normal(ks[3], (4 * N,), jnp.float32),
                w2=jax.random.normal(ks[4], (2 * cout, 4 * N), jnp.float32) / np.sqrt(4 * N),
                b2=0.1 * jax.random.normal(ks[5], (2 * cout,), jnp.float32),
            ))
    return params


def build_blockdiag_weights(params, subbands, N, C):
    """Stack all 2K MLPs into block-diagonal fc_1 / fc_2 matrices (bf16).

    GroupNorm gamma/beta are folded into fc_1.  fc_2 columns are laid out as
    [all GLU a-halves (stride Cp per group) | all gate-halves], with the total
    half-width GCp padded to a multiple of 128 for lane-dense stores.
    """
    K = len(subbands)
    G, H = 2 * K, 4 * N
    widths = [e - s for s, e in subbands]
    Cp = max(2 * C * w for w in widths)
    GCp = ((G * Cp + 127) // 128) * 128
    KN, GH = K * N, G * H

    w1_bd = np.zeros((KN, GH), np.float32)
    b1_bd = np.zeros((1, GH), np.float32)
    w2_bd = np.zeros((GH, 2 * GCp), np.float32)
    b2_bd = np.zeros((1, 2 * GCp), np.float32)

    order = [("mask", i) for i in range(K)] + [("res", i) for i in range(K)]
    for g, (bank, i) in enumerate(order):
        p = {k: np.asarray(v) for k, v in params[bank][i].items()}
        cout = 2 * C * widths[i]
        # Fold GroupNorm affine into fc_1:
        #   (gamma*xhat + beta) @ W1^T + b1 = xhat @ (diag(gamma) W1^T) + (W1 beta + b1)
        w1_bd[i * N:(i + 1) * N, g * H:(g + 1) * H] = (p["w1"] * p["gamma"][None, :]).T
        b1_bd[0, g * H:(g + 1) * H] = p["w1"] @ p["beta"] + p["b1"]
        # fc_2 split into GLU halves; zero-padded columns give a=0 -> output 0.
        w2_bd[g * H:(g + 1) * H, g * Cp:g * Cp + cout] = p["w2"][:cout].T
        w2_bd[g * H:(g + 1) * H, GCp + g * Cp:GCp + g * Cp + cout] = p["w2"][cout:].T
        b2_bd[0, g * Cp:g * Cp + cout] = p["b2"][:cout]
        b2_bd[0, GCp + g * Cp:GCp + g * Cp + cout] = p["b2"][cout:]
    return (jnp.asarray(w1_bd, jnp.bfloat16), jnp.asarray(b1_bd),
            jnp.asarray(w2_bd, jnp.bfloat16), jnp.asarray(b2_bd), Cp, GCp)


def build_expand_operator(K, N):
    """(K, K*N) ones-in-block operator: expands per-subband stats to lanes."""
    return jnp.asarray(np.kron(np.eye(K, dtype=np.float32),
                               np.ones((1, N), np.float32)))


def build_gather_indices(subbands, C, Cp, K):
    """Lane indices mapping the (B*T, GCp) slab back to (C, F, 2) per bank."""
    F = sum(e - s for s, e in subbands)
    idx_mask = np.zeros((C, F, 2), np.int32)
    idx_res = np.zeros((C, F, 2), np.int32)
    off = 0
    for i, (s, e) in enumerate(subbands):
        w = e - s
        for g2 in range(2):
            for c in range(C):
                for f in range(w):
                    col = g2 * C * w + c * w + f
                    idx_mask[c, off + f, g2] = i * Cp + col
                    idx_res[c, off + f, g2] = (K + i) * Cp + col
        off += w
    return jnp.asarray(idx_mask), jnp.asarray(idx_res)


# ---------------------------------------------------------------------------
# Pure-JAX reference (mirrors the PyTorch forward exactly, f32).
# ---------------------------------------------------------------------------
def ref_forward(x_bnkt, params, subbands, C):
    B, N, K, T = x_bnkt.shape
    banks = {"mask": [], "res": []}
    for i, (s, e) in enumerate(subbands):
        w = e - s
        xi = x_bnkt[:, :, i, :]                          # (B, N, T)
        for bank in ("mask", "res"):
            p = params[bank][i]
            mean = xi.mean(axis=(1, 2), keepdims=True)
            var = ((xi - mean) ** 2).mean(axis=(1, 2), keepdims=True)
            xn = (xi - mean) * lax.rsqrt(var + EPS)
            xn = xn * p["gamma"][None, :, None] + p["beta"][None, :, None]
            h = jnp.tanh(jnp.einsum("oi,bit->bot", p["w1"], xn) + p["b1"][None, :, None])
            y = jnp.einsum("oi,bit->bot", p["w2"], h) + p["b2"][None, :, None]
            cout = 2 * C * w
            out = y[:, :cout] * jax.nn.sigmoid(y[:, cout:])      # GLU(dim=1)
            banks[bank].append(out.reshape(B, 2, C, w, T))
    mask = jnp.moveaxis(jnp.concatenate(banks["mask"], axis=3), 1, -1)
    res = jnp.moveaxis(jnp.concatenate(banks["res"], axis=3), 1, -1)
    return mask, res


if __name__ == "__main__":
    B, N, T, C = 2, 16, 8, 2                             # batch, input_channels, time, output_channels
    subbands = ((0, 2), (2, 5), (5, 8), (8, 12))         # K = 4 subbands, widths 2/3/3/4
    K = len(subbands)
    F = sum(e - s for s, e in subbands)

    key = jax.random.PRNGKey(0)
    kx, kp = jax.random.split(key)
    x = jax.random.normal(kx, (B, N, K, T), jnp.float32)  # PyTorch layout (B, N, K, T)

    params = make_params(kp, subbands, N, C)
    w1_bd, b1_bd, w2_bd, b2_bd, Cp, GCp = build_blockdiag_weights(params, subbands, N, C)
    ek = build_expand_operator(K, N)
    idx_mask, idx_res = build_gather_indices(subbands, C, Cp, K)

    # tm=8 exercises a real 2-step parallel token grid at these toy sizes;
    # use 128 (v5e) / 256 (v6e, v7x) at production T.
    mask, res = separator_forward(x, ek, w1_bd, b1_bd, w2_bd, b2_bd,
                                  idx_mask, idx_res, tm=8)
    mask, res = jax.block_until_ready((mask, res))

    assert mask.shape == (B, C, F, T, 2) and res.shape == (B, C, F, T, 2)

    mref, rref = ref_forward(x, params, subbands, C)
    np.testing.assert_allclose(np.asarray(mask), np.asarray(mref), atol=2e-2, rtol=2e-2)
    np.testing.assert_allclose(np.asarray(res), np.asarray(rref), atol=2e-2, rtol=2e-2)

    print("KERNEL_OK")
</pallas_src>

<mosaic_0001>
module attributes {stable_mosaic.version = 11 : i64} {
  func.func @_separator_kernel(%arg0: i32, %arg1: memref<8x64xf32, #tpu.memory_space<vmem>>, %arg2: memref<8x4xf32, #tpu.memory_space<vmem>>, %arg3: memref<8x4xf32, #tpu.memory_space<vmem>>, %arg4: memref<4x64xf32, #tpu.memory_space<vmem>>, %arg5: memref<64x512xbf16, #tpu.memory_space<vmem>>, %arg6: memref<1x512xf32, #tpu.memory_space<vmem>>, %arg7: memref<512x256xbf16, #tpu.memory_space<vmem>>, %arg8: memref<1x256xf32, #tpu.memory_space<vmem>>, %arg9: memref<8x128xf32, #tpu.memory_space<vmem>>) attributes {dimension_semantics = [#tpu.dimension_semantics<parallel>], iteration_bounds = array<i64: 2>, scalar_prefetch = 0 : i64, scratch_operands = 0 : i64, tpu.core_type = #tpu.core_type<tc>, window_params = [{transform_indices = @transform_0, window_bounds = array<i64: 8, 64>}, {transform_indices = @transform_1, window_bounds = array<i64: 8, 4>}, {transform_indices = @transform_2, window_bounds = array<i64: 8, 4>}, {pipeline_mode = #tpu.pipeline_mode<synchronous>, transform_indices = @transform_3, window_bounds = array<i64: 4, 64>}, {pipeline_mode = #tpu.pipeline_mode<synchronous>, transform_indices = @transform_4, window_bounds = array<i64: 64, 512>}, {pipeline_mode = #tpu.pipeline_mode<synchronous>, transform_indices = @transform_5, window_bounds = array<i64: 1, 512>}, {pipeline_mode = #tpu.pipeline_mode<synchronous>, transform_indices = @transform_6, window_bounds = array<i64: 512, 256>}, {pipeline_mode = #tpu.pipeline_mode<synchronous>, transform_indices = @transform_7, window_bounds = array<i64: 1, 256>}, {transform_indices = @transform_8, window_bounds = array<i64: 8, 128>}]} {
    %c0 = arith.constant 0 : index
    %c0_0 = arith.constant 0 : index
    %0 = vector.load %arg1[%c0, %c0_0] : memref<8x64xf32, #tpu.memory_space<vmem>>, vector<8x64xf32>
    %c0_1 = arith.constant 0 : index
    %c0_2 = arith.constant 0 : index
    %1 = vector.load %arg4[%c0_1, %c0_2] : memref<4x64xf32, #tpu.memory_space<vmem>>, vector<4x64xf32>
    %c0_3 = arith.constant 0 : index
    %c0_4 = arith.constant 0 : index
    %2 = vector.load %arg2[%c0_3, %c0_4] : memref<8x4xf32, #tpu.memory_space<vmem>>, vector<8x4xf32>
    %cst = arith.constant dense<0.000000e+00> : vector<8x64xf32>
    %3 = tpu.matmul %2, %1, %cst {dimension_numbers = #tpu.dot_dimension_numbers<[1], [0], [0], [1], [0, 0, 1, 1], [], []>} : vector<8x4xf32>, vector<4x64xf32>, vector<8x64xf32> -> vector<8x64xf32>
    %c0_5 = arith.constant 0 : index
    %c0_6 = arith.constant 0 : index
    %4 = vector.load %arg3[%c0_5, %c0_6] : memref<8x4xf32, #tpu.memory_space<vmem>>, vector<8x4xf32>
    %cst_7 = arith.constant dense<0.000000e+00> : vector<8x64xf32>
    %5 = tpu.matmul %4, %1, %cst_7 {dimension_numbers = #tpu.dot_dimension_numbers<[1], [0], [0], [1], [0, 0, 1, 1], [], []>} : vector<8x4xf32>, vector<4x64xf32>, vector<8x64xf32> -> vector<8x64xf32>
    %6 = arith.mulf %0, %3 : vector<8x64xf32>
    %7 = arith.addf %6, %5 : vector<8x64xf32>
    %8 = arith.truncf %7 : vector<8x64xf32> to vector<8x64xbf16>
    %c0_8 = arith.constant 0 : index
    %c0_9 = arith.constant 0 : index
    %9 = vector.load %arg5[%c0_8, %c0_9] : memref<64x512xbf16, #tpu.memory_space<vmem>>, vector<64x512xbf16>
    %cst_10 = arith.constant dense<0.000000e+00> : vector<8x512xf32>
    %10 = tpu.matmul %8, %9, %cst_10 {dimension_numbers = #tpu.dot_dimension_numbers<[1], [0], [0], [1], [0, 0, 1, 1], [], []>} : vector<8x64xbf16>, vector<64x512xbf16>, vector<8x512xf32> -> vector<8x512xf32>
    %c0_11 = arith.constant 0 : index
    %c0_12 = arith.constant 0 : index
    %11 = vector.load %arg6[%c0_11, %c0_12] : memref<1x512xf32, #tpu.memory_space<vmem>>, vector<1x512xf32>
    %12 = vector.broadcast %11 : vector<1x512xf32> to vector<8x512xf32>
    %13 = arith.addf %10, %12 : vector<8x512xf32>
    %14 = math.tanh %13 : vector<8x512xf32>
    %15 = arith.truncf %14 : vector<8x512xf32> to vector<8x512xbf16>
    %c0_13 = arith.constant 0 : index
    %c0_14 = arith.constant 0 : index
    %16 = vector.load %arg7[%c0_13, %c0_14] : memref<512x256xbf16, #tpu.memory_space<vmem>>, vector<512x256xbf16>
    %cst_15 = arith.constant dense<0.000000e+00> : vector<8x256xf32>
    %17 = tpu.matmul %15, %16, %cst_15 {dimension_numbers = #tpu.dot_dimension_numbers<[1], [0], [0], [1], [0, 0, 1, 1], [], []>} : vector<8x512xbf16>, vector<512x256xbf16>, vector<8x256xf32> -> vector<8x256xf32>
    %c0_16 = arith.constant 0 : index
    %c0_17 = arith.constant 0 : index
    %18 = vector.load %arg8[%c0_16, %c0_17] : memref<1x256xf32, #tpu.memory_space<vmem>>, vector<1x256xf32>
    %19 = vector.broadcast %18 : vector<1x256xf32> to vector<8x256xf32>
    %20 = arith.addf %17, %19 : vector<8x256xf32>
    %21 = vector.extract_strided_slice %20 {offsets = [0, 0], sizes = [8, 128], strides = [1, 1]} : vector<8x256xf32> to vector<8x128xf32>
    %22 = vector.extract_strided_slice %20 {offsets = [0, 128], sizes = [8, 128], strides = [1, 1]} : vector<8x256xf32> to vector<8x128xf32>
    %23 = arith.negf %22 : vector<8x128xf32>
    %24 = math.exp %23 : vector<8x128xf32>
    %cst_18 = arith.constant 1.000000e+00 : f32
    %25 = vector.broadcast %cst_18 : f32 to vector<8x128xf32>
    %26 = arith.addf %25, %24 : vector<8x128xf32>
    %27 = arith.divf %25, %26 : vector<8x128xf32>
    %28 = arith.mulf %21, %27 : vector<8x128xf32>
    %c0_19 = arith.constant 0 : index
    %c0_20 = arith.constant 0 : index
    %29 = vector.load %arg9[%c0_19, %c0_20] : memref<8x128xf32, #tpu.memory_space<vmem>>, vector<8x128xf32>
    tpu.vector_store %arg9[%c0_19, %c0_20], %28 {strides = array<i32>} : memref<8x128xf32, #tpu.memory_space<vmem>>, vector<8x128xf32>,
    return
  }
  func.func @transform_0(%arg0: i32) -> (i32, i32) {
    %c0_i32 = arith.constant 0 : i32
    %c0_i32_0 = arith.constant 0 : i32
    return %arg0, %c0_i32 : i32, i32
  }
  func.func @transform_1(%arg0: i32) -> (i32, i32) {
    %c0_i32 = arith.constant 0 : i32
    %c0_i32_0 = arith.constant 0 : i32
    return %arg0, %c0_i32 : i32, i32
  }
  func.func @transform_2(%arg0: i32) -> (i32, i32) {
    %c0_i32 = arith.constant 0 : i32
    %c0_i32_0 = arith.constant 0 : i32
    return %arg0, %c0_i32 : i32, i32
  }
  func.func @transform_3(%arg0: i32) -> (i32, i32) {
    %c0_i32 = arith.constant 0 : i32
    %c0_i32_0 = arith.constant 0 : i32
    %c0_i32_1 = arith.constant 0 : i32
    return %c0_i32, %c0_i32_0 : i32, i32
  }
  func.func @transform_4(%arg0: i32) -> (i32, i32) {
    %c0_i32 = arith.constant 0 : i32
    %c0_i32_0 = arith.constant 0 : i32
    %c0_i32_1 = arith.constant 0 : i32
    return %c0_i32, %c0_i32_0 : i32, i32
  }
  func.func @transform_5(%arg0: i32) -> (i32, i32) {
    %c0_i32 = arith.constant 0 : i32
    %c0_i32_0 = arith.constant 0 : i32
    %c0_i32_1 = arith.constant 0 : i32
    return %c0_i32, %c0_i32_0 : i32, i32
  }
  func.func @transform_6(%arg0: i32) -> (i32, i32) {
    %c0_i32 = arith.constant 0 : i32
    %c0_i32_0 = arith.constant 0 : i32
    %c0_i32_1 = arith.constant 0 : i32
    return %c0_i32, %c0_i32_0 : i32, i32
  }
  func.func @transform_7(%arg0: i32) -> (i32, i32) {
    %c0_i32 = arith.constant 0 : i32
    %c0_i32_0 = arith.constant 0 : i32
    %c0_i32_1 = arith.constant 0 : i32
    return %c0_i32, %c0_i32_0 : i32, i32
  }
  func.func @transform_8(%arg0: i32) -> (i32, i32) {
    %c0_i32 = arith.constant 0 : i32
    %c0_i32_0 = arith.constant 0 : i32
    return %arg0, %c0_i32 : i32, i32
  }
}

</mosaic_0001>

<llo_original>
// kernel: separator_forward.1
$region0: #{separator_forward.1}
  #allocation0 [shape = 'u32[]', space=smem, size = 0x4, offset = 0x4, fixed_abs, tag = 'smem constant byte address 0x4 - core index']
  #allocation1 [shape = 'u32[144,128]{1,0:T(1,128)}', space=vmem, size = 0x12000, scoped, tag = 'internal scratch']
  %s0 = inlined_call_operand.vmem [shape: f32[16,64], index: 0, kind: input, shape index: {}]
  %s1 = inlined_call_operand.vmem [shape: f32[16,4], index: 1, kind: input, shape index: {}]
  %s2 = inlined_call_operand.vmem [shape: f32[16,4], index: 2, kind: input, shape index: {}]
  %s3 = inlined_call_operand.vmem [shape: f32[4,64], index: 3, kind: input, shape index: {}]
  %s4 = inlined_call_operand.vmem [shape: bf16[64,512], index: 4, kind: input, shape index: {}]
  %s5 = inlined_call_operand.vmem [shape: f32[1,512], index: 5, kind: input, shape index: {}]
  %s6 = inlined_call_operand.hbm [shape: bf16[512,256], index: 6, kind: input, shape index: {}]
  %s7 = inlined_call_operand.vmem [shape: f32[1,256], index: 7, kind: input, shape index: {}]
  %s8 = inlined_call_operand.vmem [shape: f32[16,128], index: 8, kind: output, shape index: {}]
  %s9 = sld [smem:[#allocation0]]
  $region69: #{separator_forward.1} parent=0
    _
  %s11 = ssub.s32 1, %s9
  %s12 = scalar_select 0, %s11, %s9
  $region1: #{separator_forward.1} parent=0
    #allocation2 [shape = 'u8[262144]{0}', space=vmem, size = 0x40000, scoped, tag = 'input window, operand 6, single buffered']
    #allocation3 [shape = 's32[2]{0}', space=sflag, size = 0x8, scoped, tag = 'scoped memory for separator_forward.1']
    %13 = vsyncpa [#allocation3], 0
    loop: start=0, step=1, limit=4
    $region2: #{separator_forward.1} parent=1 // loop_pre_header
      _
    $region3: #{separator_forward.1} parent=1 // loop_header
      %s15 = sphi 0, %s19
      %p16 = scmp.ge.s32.totalorder %s15, 4
      %s25 = sphi 0, %s27
      %s28 = sphi 0, %s25
      %s29 = sphi 0, %s28
      %s45 = sphi 0, %s29
      %s51 = sphi 0, %s53
      %s54 = sphi 0, %s51
      %s55 = sphi 0, %s54
      %s71 = sphi 0, %s55
      %s77 = sphi 0, %s79
      %s80 = sphi 0, %s77
      %s81 = sphi 0, %s80
      %s97 = sphi 0, %s81
      %s101 = sphi 0, %s101
      %s103 = sphi 0, %s101
      %s104 = sphi 0, %s103
      %s118 = sphi 0, %s104
      %s122 = sphi 0, %s122
      %s124 = sphi 0, %s122
      %s125 = sphi 0, %s124
      %s139 = sphi 0, %s125
      %s143 = sphi 0, %s143
      %s145 = sphi 0, %s143
      %s146 = sphi 0, %s145
      %s160 = sphi 0, %s146
      %s164 = sphi 0, %s164
      %s166 = sphi 0, %s164
      %s167 = sphi 0, %s166
      %s181 = sphi 0, %s167
      %s185 = sphi 0, %s185
      %s187 = sphi 0, %s185
      %s188 = sphi 0, %s187
      %s202 = sphi 0, %s188
      %s208 = sphi 0, %s210
      %s211 = sphi 0, %s208
      %s212 = sphi 0, %s211
      %s228 = sphi 0, %s212
    $region4: #{separator_forward.1} parent=1 // loop_header_branch
      %18 = sbr.rel (%p16) target = $region8
    $region5: #{separator_forward.1} parent=1 // loop_body
      %s20 = ssub.s32 %s15, 1
      %s21 = ssub.s32 %s15, 2
      %s22 = sadd.s32 %s15, 1
      %s23 = ssub.s32 %s15, %s22
      %p24 = scmp.eq.s32.totalorder %s23, 0
      %s26 = sadd.s32 %s25, 1
      %s27 = scalar_select %p24, %s25, %s26
      %p30 = pneg %p24
      %p31 = scmp.eq.s32.totalorder %s15, 1
      %p32 = por %p30, %p31
      %p33 = scmp.ne.s32.totalorder %s25, %s28
      %p34 = scmp.eq.s32.totalorder %s15, 0
      %p35 = por %p33, %p34
      %p36 = scmp.ne.s32.totalorder %s25, %s28
      %p37 = scmp.eq.s32.totalorder %s20, 1
      %p38 = por %p36, %p37
      %p39 = scmp.ne.s32.totalorder %s28, %s29
      %p40 = scmp.eq.s32.totalorder %s20, 0
      %p41 = por %p39, %p40
      %p42 = scmp.ne.s32.totalorder %s28, %s29
      %p43 = scmp.eq.s32.totalorder %s21, 1
      %p44 = por %p42, %p43
      %p46 = scmp.ne.s32.totalorder %s29, %s45
      %p47 = scmp.eq.s32.totalorder %s21, 0
      %p48 = por %p46, %p47
      %s49 = ssub.s32 %s15, %s22
      %p50 = scmp.eq.s32.totalorder %s49, 0
      %s52 = sadd.s32 %s51, 1
      %s53 = scalar_select %p50, %s51, %s52
      %p56 = pneg %p50
      %p57 = scmp.eq.s32.totalorder %s15, 1
      %p58 = por %p56, %p57
      %p59 = scmp.ne.s32.totalorder %s51, %s54
      %p60 = scmp.eq.s32.totalorder %s15, 0
      %p61 = por %p59, %p60
      %p62 = scmp.ne.s32.totalorder %s51, %s54
      %p63 = scmp.eq.s32.totalorder %s20, 1
      %p64 = por %p62, %p63
      %p65 = scmp.ne.s32.totalorder %s54, %s55
      %p66 = scmp.eq.s32.totalorder %s20, 0
      %p67 = por %p65, %p66
      %p68 = scmp.ne.s32.totalorder %s54, %s55
      %p69 = scmp.eq.s32.totalorder %s21, 1
      %p70 = por %p68, %p69
      %p72 = scmp.ne.s32.totalorder %s55, %s71
      %p73 = scmp.eq.s32.totalorder %s21, 0
      %p74 = por %p72, %p73
      %s75 = ssub.s32 %s15, %s22
      %p76 = scmp.eq.s32.totalorder %s75, 0
      %s78 = sadd.s32 %s77, 1
      %s79 = scalar_select %p76, %s77, %s78
      %p82 = pneg %p76
      %p83 = scmp.eq.s32.totalorder %s15, 1
      %p84 = por %p82, %p83
      %p85 = scmp.ne.s32.totalorder %s77, %s80
      %p86 = scmp.eq.s32.totalorder %s15, 0
      %p87 = por %p85, %p86
      %p88 = scmp.ne.s32.totalorder %s77, %s80
      %p89 = scmp.eq.s32.totalorder %s20, 1
      %p90 = por %p88, %p89
      %p91 = scmp.ne.s32.totalorder %s80, %s81
      %p92 = scmp.eq.s32.totalorder %s20, 0
      %p93 = por %p91, %p92
      %p94 = scmp.ne.s32.totalorder %s80, %s81
      %p95 = scmp.eq.s32.totalorder %s21, 1
      %p96 = por %p94, %p95
      %p98 = scmp.ne.s32.totalorder %s81, %s97
      %p99 = scmp.eq.s32.totalorder %s21, 0
      %p100 = por %p98, %p99
      %s102 = sadd.s32 %s101, 1
      %p105 = scmp.eq.s32.totalorder %s15, 1
      %p106 = scmp.ne.s32.totalorder %s101, %s103
      %p107 = scmp.eq.s32.totalorder %s15, 0
      %p108 = por %p106, %p107
      %p109 = scmp.ne.s32.totalorder %s101, %s103
      %p110 = scmp.eq.s32.totalorder %s20, 1
      %p111 = por %p109, %p110
      %p112 = scmp.ne.s32.totalorder %s103, %s104
      %p113 = scmp.eq.s32.totalorder %s20, 0
      %p114 = por %p112, %p113
      %p115 = scmp.ne.s32.totalorder %s103, %s104
      %p116 = scmp.eq.s32.totalorder %s21, 1
      %p117 = por %p115, %p116
      %p119 = scmp.ne.s32.totalorder %s104, %s118
      %p120 = scmp.eq.s32.totalorder %s21, 0
      %p121 = por %p119, %p120
      %s123 = sadd.s32 %s122, 1
      %p126 = scmp.eq.s32.totalorder %s15, 1
      %p127 = scmp.ne.s32.totalorder %s122, %s124
      %p128 = scmp.eq.s32.totalorder %s15, 0
      %p129 = por %p127, %p128
      %p130 = scmp.ne.s32.totalorder %s122, %s124
      %p131 = scmp.eq.s32.totalorder %s20, 1
      %p132 = por %p130, %p131
      %p133 = scmp.ne.s32.totalorder %s124, %s125
      %p134 = scmp.eq.s32.totalorder %s20, 0
      %p135 = por %p133, %p134
      %p136 = scmp.ne.s32.totalorder %s124, %s125
      %p137 = scmp.eq.s32.totalorder %s21, 1
      %p138 = por %p136, %p137
      %p140 = scmp.ne.s32.totalorder %s125, %s139
      %p141 = scmp.eq.s32.totalorder %s21, 0
      %p142 = por %p140, %p141
      %s144 = sadd.s32 %s143, 1
      %p147 = scmp.eq.s32.totalorder %s15, 1
      %p148 = scmp.ne.s32.totalorder %s143, %s145
      %p149 = scmp.eq.s32.totalorder %s15, 0
      %p150 = por %p148, %p149
      %p151 = scmp.ne.s32.totalorder %s143, %s145
      %p152 = scmp.eq.s32.totalorder %s20, 1
      %p153 = por %p151, %p152
      %p154 = scmp.ne.s32.totalorder %s145, %s146
      %p155 = scmp.eq.s32.totalorder %s20, 0
      %p156 = por %p154, %p155
      %p157 = scmp.ne.s32.totalorder %s145, %s146
      %p158 = scmp.eq.s32.totalorder %s21, 1
      %p159 = por %p157, %p158
      %p161 = scmp.ne.s32.totalorder %s146, %s160
      %p162 = scmp.eq.s32.totalorder %s21, 0
      %p163 = por %p161, %p162
      %s165 = sadd.s32 %s164, 1
      %p168 = scmp.eq.s32.totalorder %s15, 1
      %p169 = scmp.ne.s32.totalorder %s164, %s166
      %p170 = scmp.eq.s32.totalorder %s15, 0
      %p171 = por %p169, %p170
      %p172 = scmp.ne.s32.totalorder %s164, %s166
      %p173 = scmp.eq.s32.totalorder %s20, 1
      %p174 = por %p172, %p173
      %p175 = scmp.ne.s32.totalorder %s166, %s167
      %p176 = scmp.eq.s32.totalorder %s20, 0
      %p177 = por %p175, %p176
      %p178 = scmp.ne.s32.totalorder %s166, %s167
      %p179 = scmp.eq.s32.totalorder %s21, 1
      %p180 = por %p178, %p179
      %p182 = scmp.ne.s32.totalorder %s167, %s181
      %p183 = scmp.eq.s32.totalorder %s21, 0
      %p184 = por %p182, %p183
      %s186 = sadd.s32 %s185, 1
      %p189 = scmp.eq.s32.totalorder %s15, 1
      %p190 = scmp.ne.s32.totalorder %s185, %s187
      %p191 = scmp.eq.s32.totalorder %s15, 0
      %p192 = por %p190, %p191
      %p193 = scmp.ne.s32.totalorder %s185, %s187
      %p194 = scmp.eq.s32.totalorder %s20, 1
      %p195 = por %p193, %p194
      %p196 = scmp.ne.s32.totalorder %s187, %s188
      %p197 = scmp.eq.s32.totalorder %s20, 0
      %p198 = por %p196, %p197
      %p199 = scmp.ne.s32.totalorder %s187, %s188
      %p200 = scmp.eq.s32.totalorder %s21, 1
      %p201 = por %p199, %p200
      %p203 = scmp.ne.s32.totalorder %s188, %s202
      %p204 = scmp.eq.s32.totalorder %s21, 0
      %p205 = por %p203, %p204
      %s206 = ssub.s32 %s15, %s22
      %p207 = scmp.eq.s32.totalorder %s206, 0
      %s209 = sadd.s32 %s208, 1
      %s210 = scalar_select %p207, %s208, %s209
      %p213 = pneg %p207
      %p214 = scmp.eq.s32.totalorder %s15, 1
      %p215 = por %p213, %p214
      %p216 = scmp.ne.s32.totalorder %s208, %s211
      %p217 = scmp.eq.s32.totalorder %s15, 0
      %p218 = por %p216, %p217
      %p219 = scmp.ne.s32.totalorder %s208, %s211
      %p220 = scmp.eq.s32.totalorder %s20, 1
      %p221 = por %p219, %p220
      %p222 = scmp.ne.s32.totalorder %s211, %s212
      %p223 = scmp.eq.s32.totalorder %s20, 0
      %p224 = por %p222, %p223
      %p225 = scmp.ne.s32.totalorder %s211, %s212
      %p226 = scmp.eq.s32.totalorder %s21, 1
      %p227 = por %p225, %p226
      %p229 = scmp.ne.s32.totalorder %s212, %s228
      %p230 = scmp.eq.s32.totalorder %s21, 0
      %p231 = por %p229, %p230
      %p232 = scmp.le.s32.totalorder 1, %s15
      %p233 = scmp.lt.s32.totalorder %s15, 3
      %p234 = pnand %p232, %p233
      %p235 = pneg %p234
      // Predicated region
      $region9: #{separator_forward.1} parent=5 // pred_check
        _
      $region10: #{separator_forward.1} parent=5 // pred_check_branch
        %237 = sbr.rel (%p234) target = $region12
      $region11: #{separator_forward.1} parent=5 // pred_region
        %s238 = ssub.s32 %s15, 1
        // Predicated region
        $region13: #{separator_forward.1} parent=11 // pred_check
          %p239 = pneg %p114
        $region14: #{separator_forward.1} parent=11 // pred_check_branch
          %241 = sbr.rel (%p239) target = $region16
        $region15: #{separator_forward.1} parent=11 // pred_region
          _
        $region16: #{separator_forward.1} parent=11 // pred_fallthru
          _
        // Predicated region
        $region17: #{separator_forward.1} parent=11 // pred_check
          %p242 = pneg %p135
        $region18: #{separator_forward.1} parent=11 // pred_check_branch
          %244 = sbr.rel (%p242) target = $region20
        $region19: #{separator_forward.1} parent=11 // pred_region
          _
        $region20: #{separator_forward.1} parent=11 // pred_fallthru
          _
        // Predicated region
        $region21: #{separator_forward.1} parent=11 // pred_check
          %p245 = pneg %p156
        $region22: #{separator_forward.1} parent=11 // pred_check_branch
          %247 = sbr.rel (%p245) target = $region24
        $region23: #{separator_forward.1} parent=11 // pred_region
          _
        $region24: #{separator_forward.1} parent=11 // pred_fallthru
          _
        // Predicated region
        $region25: #{separator_forward.1} parent=11 // pred_check
          %p248 = pneg %p177
        $region26: #{separator_forward.1} parent=11 // pred_check_branch
          %250 = sbr.rel (%p248) target = $region28
        $region27: #{separator_forward.1} parent=11 // pred_region
          %s252 = ssub.s32 8192, 8192
          %253 = vsyncadd [#allocation3], %s252
          %s254 = sshll.u32 [#allocation2], 4
          %s255 = int_to_ptr.vmem [resolvable:$true] %s254
          %260 = dma.hbm_to_vmem [thread:$0]  %s6, 8192, %s255, [#allocation3], 128, 128, 8
        $region28: #{separator_forward.1} parent=11 // pred_fallthru
          _
        // Predicated region
        $region29: #{separator_forward.1} parent=11 // pred_check
          %p261 = pneg %p198
        $region30: #{separator_forward.1} parent=11 // pred_check_branch
          %263 = sbr.rel (%p261) target = $region32
        $region31: #{separator_forward.1} parent=11 // pred_region
          _
        $region32: #{separator_forward.1} parent=11 // pred_fallthru
          _
      $region12: #{separator_forward.1} parent=5 // pred_fallthru
        _
      %p264 = scmp.lt.s32.totalorder %s15, 2
      // Predicated region
      $region33: #{separator_forward.1} parent=5 // pred_check
        %p265 = pneg %p264
      $region34: #{separator_forward.1} parent=5 // pred_check_branch
        %267 = sbr.rel (%p265) target = $region36
      $region35: #{separator_forward.1} parent=5 // pred_region
        // Predicated region
        $region37: #{separator_forward.1} parent=35 // pred_check
          %p268 = pneg %p35
        $region38: #{separator_forward.1} parent=35 // pred_check_branch
          %270 = sbr.rel (%p268) target = $region40
        $region39: #{separator_forward.1} parent=35 // pred_region
          %p271 = scmp.lt.s32.totalorder %s15, 1
          %s272 = scalar_select %p271, %s15, 1
          %s273 = smul.addr %s272, 8
          %s274 = scalar_lea.vmem %s0, %s273
        $region40: #{separator_forward.1} parent=35 // pred_fallthru
          _
        // Predicated region
        $region41: #{separator_forward.1} parent=35 // pred_check
          %p275 = pneg %p61
        $region42: #{separator_forward.1} parent=35 // pred_check_branch
          %277 = sbr.rel (%p275) target = $region44
        $region43: #{separator_forward.1} parent=35 // pred_region
          %p278 = scmp.lt.s32.totalorder %s15, 1
          %s279 = scalar_select %p278, %s15, 1
          %s280 = smul.addr %s279, 8
          %s281 = scalar_lea.vmem %s1, %s280
        $region44: #{separator_forward.1} parent=35 // pred_fallthru
          _
        // Predicated region
        $region45: #{separator_forward.1} parent=35 // pred_check
          %p282 = pneg %p87
        $region46: #{separator_forward.1} parent=35 // pred_check_branch
          %284 = sbr.rel (%p282) target = $region48
        $region47: #{separator_forward.1} parent=35 // pred_region
          %p285 = scmp.lt.s32.totalorder %s15, 1
          %s286 = scalar_select %p285, %s15, 1
          %s287 = smul.addr %s286, 8
          %s288 = scalar_lea.vmem %s2, %s287
        $region48: #{separator_forward.1} parent=35 // pred_fallthru
          _
      $region36: #{separator_forward.1} parent=5 // pred_fallthru
        _
      %p289 = scmp.le.s32.totalorder 1, %s15
      %p290 = scmp.lt.s32.totalorder %s15, 3
      %p291 = pnand %p289, %p290
      %p292 = pneg %p291
      // Predicated region
      $region49: #{separator_forward.1} parent=5 // pred_check
        _
      $region50: #{separator_forward.1} parent=5 // pred_check_branch
        %294 = sbr.rel (%p291) target = $region52
      $region51: #{separator_forward.1} parent=5 // pred_region
        %s295 = ssub.s32 %s15, 1
        // Predicated region
        $region53: #{separator_forward.1} parent=51 // pred_check
          %p296 = pneg %p177
        $region54: #{separator_forward.1} parent=51 // pred_check_branch
          %298 = sbr.rel (%p296) target = $region56
        $region55: #{separator_forward.1} parent=51 // pred_region
          %299 = dma.done [#allocation3], 8192
        $region56: #{separator_forward.1} parent=51 // pred_fallthru
          _
        %p300 = scmp.lt.s32.totalorder %s20, 1
        %s301 = scalar_select %p300, %s20, 1
        %s302 = smul.addr %s301, 8
        %s303 = scalar_lea.vmem %s0, %s302
        %p304 = pneg %p41
        %p305 = pneg %p38
        %p306 = scmp.lt.s32.totalorder %s20, 1
        %s307 = scalar_select %p306, %s20, 1
        %s308 = smul.addr %s307, 8
        %s309 = scalar_lea.vmem %s1, %s308
        %p310 = pneg %p67
        %p311 = pneg %p64
        %p312 = scmp.lt.s32.totalorder %s20, 1
        %s313 = scalar_select %p312, %s20, 1
        %s314 = smul.addr %s313, 8
        %s315 = scalar_lea.vmem %s2, %s314
        %p316 = pneg %p93
        %p317 = pneg %p90
        %p318 = pneg %p114
        %p319 = pneg %p111
        %p320 = pneg %p135
        %p321 = pneg %p132
        %p322 = pneg %p156
        %p323 = pneg %p153
        %p324 = pneg %p177
        %p325 = pneg %p174
        %p326 = pneg %p198
        %p327 = pneg %p195
        %p328 = pneg %p224
        %p329 = pneg %p221
        %p330 = scmp.lt.s32.totalorder %s20, 1
        %s331 = scalar_select %p330, %s20, 1
        %s332 = smul.addr %s331, 8
        %s333 = scalar_lea.vmem %s8, %s332
        %p334 = scmp.lt.s32.totalorder %s20, 1
        %s335 = scalar_select %p334, %s20, 1
        %s336 = smul.addr %s335, 8
        %s337 = scalar_lea.vmem %s0, %s336
        %p338 = scmp.lt.s32.totalorder %s20, 1
        %s339 = scalar_select %p338, %s20, 1
        %s340 = smul.addr %s339, 8
        %s341 = scalar_lea.vmem %s1, %s340
        %p342 = scmp.lt.s32.totalorder %s20, 1
        %s343 = scalar_select %p342, %s20, 1
        %s344 = smul.addr %s343, 8
        %s345 = scalar_lea.vmem %s2, %s344
        %p346 = scmp.lt.s32.totalorder %s20, 1
        %s347 = scalar_select %p346, %s20, 1
        %s348 = smul.addr %s347, 8
        %s349 = scalar_lea.vmem %s8, %s348
        %v351 = vld [vmem:[%s337] sm:$0xff]
        %v352 = vld [vmem:[%s3] sm:$0xf]
        %v353 = vld [vmem:[%s341] sm:$0xff]
        %vm354 = vcmask 31744
        %v356 = vsel %vm354, %v353, 0
        %vm358 = vcmask 1043456
        %v360 = vsel %vm358, %v352, 0
        %362 = vmatprep.subr.mxu0 0.0
        %363 = vmatpush1.msra.mxu0 %v360
        %364 = vmatprep.subr.mxu0 0.0
        %365 = vmatpush1.msra.mxu0 0.0
        %366 = vmatprep.subr.mxu0 0.0
        %367 = vmatpush1.msra.mxu0 0.0
        %368 = vmatprep.subr.mxu0 0.0
        %369 = vmatpush1.msra.mxu0 0.0
        %370 = vmatprep.subr.mxu0 0.0
        %371 = vmatpush1.msra.mxu0 0.0
        %372 = vmatprep.subr.mxu0 0.0
        %373 = vmatpush1.msra.mxu0 0.0
        %374 = vmatprep.subr.mxu0 0.0
        %375 = vmatpush1.msra.mxu0 0.0
        %376 = vmatprep.subr.mxu0 0.0
        %377 = vmatpush1.msra.mxu0 0.0
        %378 = vmatprep.subr.mxu0 0.0
        %379 = vmatpush1.msra.mxu0 0.0
        %380 = vmatprep.subr.mxu0 0.0
        %381 = vmatpush1.msra.mxu0 0.0
        %382 = vmatprep.subr.mxu0 0.0
        %383 = vmatpush1.msra.mxu0 0.0
        %384 = vmatprep.subr.mxu0 0.0
        %385 = vmatpush1.msra.mxu0 0.0
        %386 = vmatprep.subr.mxu0 0.0
        %387 = vmatpush1.msra.mxu0 0.0
        %388 = vmatprep.subr.mxu0 0.0
        %389 = vmatpush1.msra.mxu0 0.0
        %390 = vmatprep.subr.mxu0 0.0
        %391 = vmatpush1.msra.mxu0 0.0
        %392 = vmatprep.subr.mxu0 0.0
        %393 = vmatpush1.msra.mxu0 0.0
        %394 = vmatprep.subr.mxu0 0.0
        %395 = vmatpush1.msra.mxu0 0.0
        %396 = vmatprep.subr.mxu0 0.0
        %397 = vmatpush1.msra.mxu0 0.0
        %398 = vmatprep.subr.mxu0 0.0
        %399 = vmatpush1.msra.mxu0 0.0
        %400 = vmatprep.subr.mxu0 0.0
        %401 = vmatpush1.msra.mxu0 0.0
        %402 = vmatprep.subr.mxu0 0.0
        %403 = vmatpush1.msra.mxu0 0.0
        %404 = vmatprep.subr.mxu0 0.0
        %405 = vmatpush1.msra.mxu0 0.0
        %406 = vmatprep.subr.mxu0 0.0
        %407 = vmatpush1.msra.mxu0 0.0
        %408 = vmatprep.subr.mxu0 0.0
        %409 = vmatpush1.msra.mxu0 0.0
        %410 = vmatprep.subr.mxu0 0.0
        %411 = vmatpush1.msra.mxu0 0.0
        %412 = vmatprep.subr.mxu0 0.0
        %413 = vmatpush1.msra.mxu0 0.0
        %414 = vmatprep.subr.mxu0 0.0
        %415 = vmatpush1.msra.mxu0 0.0
        %416 = vmatprep.subr.mxu0 0.0
        %417 = vmatpush1.msra.mxu0 0.0
        %418 = vmatprep.subr.mxu0 0.0
        %419 = vmatpush1.msra.mxu0 0.0
        %420 = vmatprep.subr.mxu0 0.0
        %421 = vmatpush1.msra.mxu0 0.0
        %422 = vmatprep.subr.mxu0 0.0
        %423 = vmatpush1.msra.mxu0 0.0
        %424 = vmatprep.subr.mxu0 0.0
        %425 = vmatpush1.msra.mxu0 0.0
        %426 = vmatprep.mubr.f32.mxu0 0.0
        %427 = vmatmul.mubr.f32.gmra.mrb[0].mxu0 %v356
        %v428 = vpop.f32.mrb[0].mxu0
        %v429 = vadd.f32 0.0, %v428
        %v430 = vpop.f32.mrb[0].mxu0
        %431 = vdwg.mxu0
        %v432 = vld [vmem:[%s345] sm:$0xff]
        %v434 = vsel %vm354, %v432, 0
        %436 = vmatprep.subr.mxu0 0.0
        %437 = vmatpush1.msra.mxu0 %v360
        %438 = vmatprep.subr.mxu0 0.0
        %439 = vmatpush1.msra.mxu0 0.0
        %440 = vmatprep.subr.mxu0 0.0
        %441 = vmatpush1.msra.mxu0 0.0
        %442 = vmatprep.subr.mxu0 0.0
        %443 = vmatpush1.msra.mxu0 0.0
        %444 = vmatprep.subr.mxu0 0.0
        %445 = vmatpush1.msra.mxu0 0.0
        %446 = vmatprep.subr.mxu0 0.0
        %447 = vmatpush1.msra.mxu0 0.0
        %448 = vmatprep.subr.mxu0 0.0
        %449 = vmatpush1.msra.mxu0 0.0
        %450 = vmatprep.subr.mxu0 0.0
        %451 = vmatpush1.msra.mxu0 0.0
        %452 = vmatprep.subr.mxu0 0.0
        %453 = vmatpush1.msra.mxu0 0.0
        %454 = vmatprep.subr.mxu0 0.0
        %455 = vmatpush1.msra.mxu0 0.0
        %456 = vmatprep.subr.mxu0 0.0
        %457 = vmatpush1.msra.mxu0 0.0
        %458 = vmatprep.subr.mxu0 0.0
        %459 = vmatpush1.msra.mxu0 0.0
        %460 = vmatprep.subr.mxu0 0.0
        %461 = vmatpush1.msra.mxu0 0.0
        %462 = vmatprep.subr.mxu0 0.0
        %463 = vmatpush1.msra.mxu0 0.0
        %464 = vmatprep.subr.mxu0 0.0
        %465 = vmatpush1.msra.mxu0 0.0
        %466 = vmatprep.subr.mxu0 0.0
        %467 = vmatpush1.msra.mxu0 0.0
        %468 = vmatprep.subr.mxu0 0.0
        %469 = vmatpush1.msra.mxu0 0.0
        %470 = vmatprep.subr.mxu0 0.0
        %471 = vmatpush1.msra.mxu0 0.0
        %472 = vmatprep.subr.mxu0 0.0
        %473 = vmatpush1.msra.mxu0 0.0
        %474 = vmatprep.subr.mxu0 0.0
        %475 = vmatpush1.msra.mxu0 0.0
        %476 = vmatprep.subr.mxu0 0.0
        %477 = vmatpush1.msra.mxu0 0.0
        %478 = vmatprep.subr.mxu0 0.0
        %479 = vmatpush1.msra.mxu0 0.0
        %480 = vmatprep.subr.mxu0 0.0
        %481 = vmatpush1.msra.mxu0 0.0
        %482 = vmatprep.subr.mxu0 0.0
        %483 = vmatpush1.msra.mxu0 0.0
        %484 = vmatprep.subr.mxu0 0.0
        %485 = vmatpush1.msra.mxu0 0.0
        %486 = vmatprep.subr.mxu0 0.0
        %487 = vmatpush1.msra.mxu0 0.0
        %488 = vmatprep.subr.mxu0 0.0
        %489 = vmatpush1.msra.mxu0 0.0
        %490 = vmatprep.subr.mxu0 0.0
        %491 = vmatpush1.msra.mxu0 0.0
        %492 = vmatprep.subr.mxu0 0.0
        %493 = vmatpush1.msra.mxu0 0.0
        %494 = vmatprep.subr.mxu0 0.0
        %495 = vmatpush1.msra.mxu0 0.0
        %496 = vmatprep.subr.mxu0 0.0
        %497 = vmatpush1.msra.mxu0 0.0
        %498 = vmatprep.subr.mxu0 0.0
        %499 = vmatpush1.msra.mxu0 0.0
        %500 = vmatprep.mubr.f32.mxu0 0.0
        %501 = vmatmul.mubr.f32.gmra.mrb[0].mxu0 %v434
        %v502 = vpop.f32.mrb[0].mxu0
        %v503 = vadd.f32 0.0, %v502
        %v504 = vpop.f32.mrb[0].mxu0
        %505 = vdwg.mxu0
        %v506 = vmul.f32 %v351, %v429
        %v507 = vadd.f32 %v506, %v503
        %v508 = vpack.c.bf16 %v507, %v507
        %v509 = vld [vmem:[%s4] sm:$0xff]
        %v510 = vld [vmem:[%s4 + $0x8] sm:$0xff]
        %v511 = vld [vmem:[%s4 + $0x10] sm:$0xff]
        %v512 = vld [vmem:[%s4 + $0x18] sm:$0xff]
        %v513 = vld [vmem:[%s4 + $0x20] sm:$0xff]
        %v514 = vld [vmem:[%s4 + $0x28] sm:$0xff]
        %v515 = vld [vmem:[%s4 + $0x30] sm:$0xff]
        %v516 = vld [vmem:[%s4 + $0x38] sm:$0xff]
        %v517 = vld [vmem:[%s4 + $0x40] sm:$0xff]
        %v518 = vld [vmem:[%s4 + $0x48] sm:$0xff]
        %v519 = vld [vmem:[%s4 + $0x50] sm:$0xff]
        %v520 = vld [vmem:[%s4 + $0x58] sm:$0xff]
        %v521 = vld [vmem:[%s4 + $0x60] sm:$0xff]
        %v522 = vld [vmem:[%s4 + $0x68] sm:$0xff]
        %v523 = vld [vmem:[%s4 + $0x70] sm:$0xff]
        %v524 = vld [vmem:[%s4 + $0x78] sm:$0xff]
        %v525 = vld [vmem:[%s5] sm:$0xf]
        %v527 = vlaneseq
        %v528 = vshrl.u32 %v527, 7
        %v529 = vsub.s32 0, %v528
        %v530 = vrot.slane %v525, %v529
        %v531 = vlaneseq
        %v532 = vshrl.u32 %v531, 7
        %v533 = vsub.s32 1, %v532
        %v534 = vrot.slane %v525, %v533
        %v535 = vlaneseq
        %v536 = vshrl.u32 %v535, 7
        %v537 = vsub.s32 2, %v536
        %v538 = vrot.slane %v525, %v537
        %v539 = vlaneseq
        %v540 = vshrl.u32 %v539, 7
        %v541 = vsub.s32 3, %v540
        %v542 = vrot.slane %v525, %v541
        %v563 = vunpack.c.l.b16 %v509
        %v564 = vunpack.c.h.b16 %v509
        %v565 = vunpack.c.l.b16 %v510
        %v566 = vunpack.c.h.b16 %v510
        %v567 = vunpack.c.l.b16 %v511
        %v568 = vunpack.c.h.b16 %v511
        %v569 = vunpack.c.l.b16 %v512
        %v570 = vunpack.c.h.b16 %v512
        %v571 = vunpack.c.l.b16 %v513
        %v572 = vunpack.c.h.b16 %v513
        %v573 = vunpack.c.l.b16 %v514
        %v574 = vunpack.c.h.b16 %v514
        %v575 = vunpack.c.l.b16 %v515
        %v576 = vunpack.c.h.b16 %v515
        %v577 = vunpack.c.l.b16 %v516
        %v578 = vunpack.c.h.b16 %v516
        %v579 = vunpack.c.l.b16 %v517
        %v580 = vunpack.c.h.b16 %v517
        %v581 = vunpack.c.l.b16 %v518
        %v582 = vunpack.c.h.b16 %v518
        %v583 = vunpack.c.l.b16 %v519
        %v584 = vunpack.c.h.b16 %v519
        %v585 = vunpack.c.l.b16 %v520
        %v586 = vunpack.c.h.b16 %v520
        %v587 = vunpack.c.l.b16 %v521
        %v588 = vunpack.c.h.b16 %v521
        %v589 = vunpack.c.l.b16 %v522
        %v590 = vunpack.c.h.b16 %v522
        %v591 = vunpack.c.l.b16 %v523
        %v592 = vunpack.c.h.b16 %v523
        %v593 = vunpack.c.l.b16 %v524
        %v594 = vunpack.c.h.b16 %v524
        %v595 = vpack.c.b16 %v567, %v563
        %v596 = vpack.c.b16 %v568, %v564
        %v597 = vpack.c.b16 %v569, %v565
        %v598 = vpack.c.b16 %v570, %v566
        %v599 = vpack.c.b16 %v575, %v571
        %v600 = vpack.c.b16 %v576, %v572
        %v601 = vpack.c.b16 %v577, %v573
        %v602 = vpack.c.b16 %v578, %v574
        %v603 = vpack.c.b16 %v583, %v579
        %v604 = vpack.c.b16 %v584, %v580
        %v605 = vpack.c.b16 %v585, %v581
        %v606 = vpack.c.b16 %v586, %v582
        %v607 = vpack.c.b16 %v591, %v587
        %v608 = vpack.c.b16 %v592, %v588
        %v609 = vpack.c.b16 %v593, %v589
        %v610 = vpack.c.b16 %v594, %v590
        %vm627 = vcmask 523264
        %v629 = vsel %vm627, %v508, 0
        %631 = vmatprep.subr.bf16.mxu0 %v596
        %632 = vmatpush1.bf16.msra.mxu0 %v595
        %633 = vmatprep.subr.bf16.mxu0 %v600
        %634 = vmatpush1.bf16.msra.mxu0 %v599
        %635 = vmatprep.subr.bf16.mxu0 %v604
        %636 = vmatpush1.bf16.msra.mxu0 %v603
        %637 = vmatprep.subr.bf16.mxu0 %v608
        %638 = vmatpush1.bf16.msra.mxu0 %v607
        %639 = vmatprep.subr.bf16.mxu0 0
        %640 = vmatpush1.bf16.msra.mxu0 0
        %641 = vmatprep.subr.bf16.mxu0 0
        %642 = vmatpush1.bf16.msra.mxu0 0
        %643 = vmatprep.subr.bf16.mxu0 0
        %644 = vmatpush1.bf16.msra.mxu0 0
        %645 = vmatprep.subr.bf16.mxu0 0
        %646 = vmatpush1.bf16.msra.mxu0 0
        %647 = vmatprep.subr.bf16.mxu0 0
        %648 = vmatpush1.bf16.msra.mxu0 0
        %649 = vmatprep.subr.bf16.mxu0 0
        %650 = vmatpush1.bf16.msra.mxu0 0
        %651 = vmatprep.subr.bf16.mxu0 0
        %652 = vmatpush1.bf16.msra.mxu0 0
        %653 = vmatprep.subr.bf16.mxu0 0
        %654 = vmatpush1.bf16.msra.mxu0 0
        %655 = vmatprep.subr.bf16.mxu0 0
        %656 = vmatpush1.bf16.msra.mxu0 0
        %657 = vmatprep.subr.bf16.mxu0 0
        %658 = vmatpush1.bf16.msra.mxu0 0
        %659 = vmatprep.subr.bf16.mxu0 0
        %660 = vmatpush1.bf16.msra.mxu0 0
        %661 = vmatprep.subr.bf16.mxu0 0
        %662 = vmatpush1.bf16.msra.mxu0 0
        %663 = vmatprep.mubr.bf16.mxu0 0
        %664 = vmatmul.mubr.bf16.gmra.mrb[0].mxu0 %v629
        %v665 = vpop.f32.mrb[0].mxu0
        %v666 = vadd.f32 %v530, %v665
        %v667 = vpop.f32.mrb[0].mxu0
        %v668 = vadd.f32 %v534, %v667
        %v669 = vpop.f32.mrb[0].mxu0
        %v670 = vpop.f32.mrb[0].mxu0
        %671 = vdwg.mxu0
        %672 = vmatprep.subr.bf16.mxu0 %v598
        %673 = vmatpush1.bf16.msra.mxu0 %v597
        %674 = vmatprep.subr.bf16.mxu0 %v602
        %675 = vmatpush1.bf16.msra.mxu0 %v601
        %676 = vmatprep.subr.bf16.mxu0 %v606
        %677 = vmatpush1.bf16.msra.mxu0 %v605
        %678 = vmatprep.subr.bf16.mxu0 %v610
        %679 = vmatpush1.bf16.msra.mxu0 %v609
        %680 = vmatprep.subr.bf16.mxu0 0
        %681 = vmatpush1.bf16.msra.mxu0 0
        %682 = vmatprep.subr.bf16.mxu0 0
        %683 = vmatpush1.bf16.msra.mxu0 0
        %684 = vmatprep.subr.bf16.mxu0 0
        %685 = vmatpush1.bf16.msra.mxu0 0
        %686 = vmatprep.subr.bf16.mxu0 0
        %687 = vmatpush1.bf16.msra.mxu0 0
        %688 = vmatprep.subr.bf16.mxu0 0
        %689 = vmatpush1.bf16.msra.mxu0 0
        %690 = vmatprep.subr.bf16.mxu0 0
        %691 = vmatpush1.bf16.msra.mxu0 0
        %692 = vmatprep.subr.bf16.mxu0 0
        %693 = vmatpush1.bf16.msra.mxu0 0
        %694 = vmatprep.subr.bf16.mxu0 0
        %695 = vmatpush1.bf16.msra.mxu0 0
        %696 = vmatprep.subr.bf16.mxu0 0
        %697 = vmatpush1.bf16.msra.mxu0 0
        %698 = vmatprep.subr.bf16.mxu0 0
        %699 = vmatpush1.bf16.msra.mxu0 0
        %700 = vmatprep.subr.bf16.mxu0 0
        %701 = vmatpush1.bf16.msra.mxu0 0
        %702 = vmatprep.subr.bf16.mxu0 0
        %703 = vmatpush1.bf16.msra.mxu0 0
        %704 = vmatprep.mubr.bf16.mxu0 0
        %705 = vmatmul.mubr.bf16.gmra.mrb[0].mxu0 %v629
        %v706 = vpop.f32.mrb[0].mxu0
        %v707 = vadd.f32 %v538, %v706
        %v708 = vpop.f32.mrb[0].mxu0
        %v709 = vadd.f32 %v542, %v708
        %v710 = vpop.f32.mrb[0].mxu0
        %v711 = vpop.f32.mrb[0].mxu0
        %712 = vdwg.mxu0
        %v713 = vtanh.pop %v666
        %v714 = vtanh.pop %v668
        %v715 = vtanh.pop %v707
        %v716 = vtanh.pop %v709
        %v717 = vpack.c.bf16 %v713, %v713
        %v718 = vpack.c.bf16 %v714, %v714
        %v719 = vpack.c.bf16 %v715, %v715
        %v720 = vpack.c.bf16 %v716, %v716
        %v721 = vld [vmem:[#allocation2] sm:$0xff]
        %v722 = vld [vmem:[#allocation2 + $0x8] sm:$0xff]
        %v723 = vld [vmem:[#allocation2 + $0x10] sm:$0xff]
        %v724 = vld [vmem:[#allocation2 + $0x18] sm:$0xff]
        %v725 = vld [vmem:[#allocation2 + $0x20] sm:$0xff]
        %v726 = vld [vmem:[#allocation2 + $0x28] sm:$0xff]
        %v727 = vld [vmem:[#allocation2 + $0x30] sm:$0xff]
        %v728 = vld [vmem:[#allocation2 + $0x38] sm:$0xff]
        %v729 = vld [vmem:[#allocation2 + $0x40] sm:$0xff]
        %v730 = vld [vmem:[#allocation2 + $0x48] sm:$0xff]
        %v731 = vld [vmem:[#allocation2 + $0x50] sm:$0xff]
        %v732 = vld [vmem:[#allocation2 + $0x58] sm:$0xff]
        %v733 = vld [vmem:[#allocation2 + $0x60] sm:$0xff]
        %v734 = vld [vmem:[#allocation2 + $0x68] sm:$0xff]
        %v735 = vld [vmem:[#allocation2 + $0x70] sm:$0xff]
        %v736 = vld [vmem:[#allocation2 + $0x78] sm:$0xff]
        %v737 = vld [vmem:[#allocation2 + $0x80] sm:$0xff]
        %v738 = vld [vmem:[#allocation2 + $0x88] sm:$0xff]
        %v739 = vld [vmem:[#allocation2 + $0x90] sm:$0xff]
        %v740 = vld [vmem:[#allocation2 + $0x98] sm:$0xff]
        %v741 = vld [vmem:[#allocation2 + $0xa0] sm:$0xff]
        %v742 = vld [vmem:[#allocation2 + $0xa8] sm:$0xff]
        %v743 = vld [vmem:[#allocation2 + $0xb0] sm:$0xff]
        %v744 = vld [vmem:[#allocation2 + $0xb8] sm:$0xff]
        %v745 = vld [vmem:[#allocation2 + $0xc0] sm:$0xff]
        %v746 = vld [vmem:[#allocation2 + $0xc8] sm:$0xff]
        %v747 = vld [vmem:[#allocation2 + $0xd0] sm:$0xff]
        %v748 = vld [vmem:[#allocation2 + $0xd8] sm:$0xff]
        %v749 = vld [vmem:[#allocation2 + $0xe0] sm:$0xff]
        %v750 = vld [vmem:[#allocation2 + $0xe8] sm:$0xff]
        %v751 = vld [vmem:[#allocation2 + $0xf0] sm:$0xff]
        %v752 = vld [vmem:[#allocation2 + $0xf8] sm:$0xff]
        %v753 = vld [vmem:[#allocation2 + $0x100] sm:$0xff]
        %v754 = vld [vmem:[#allocation2 + $0x108] sm:$0xff]
        %v755 = vld [vmem:[#allocation2 + $0x110] sm:$0xff]
        %v756 = vld [vmem:[#allocation2 + $0x118] sm:$0xff]
        %v757 = vld [vmem:[#allocation2 + $0x120] sm:$0xff]
        %v758 = vld [vmem:[#allocation2 + $0x128] sm:$0xff]
        %v759 = vld [vmem:[#allocation2 + $0x130] sm:$0xff]
        %v760 = vld [vmem:[#allocation2 + $0x138] sm:$0xff]
        %v761 = vld [vmem:[#allocation2 + $0x140] sm:$0xff]
        %v762 = vld [vmem:[#allocation2 + $0x148] sm:$0xff]
        %v763 = vld [vmem:[#allocation2 + $0x150] sm:$0xff]
        %v764 = vld [vmem:[#allocation2 + $0x158] sm:$0xff]
        %v765 = vld [vmem:[#allocation2 + $0x160] sm:$0xff]
        %v766 = vld [vmem:[#allocation2 + $0x168] sm:$0xff]
        %v767 = vld [vmem:[#allocation2 + $0x170] sm:$0xff]
        %v768 = vld [vmem:[#allocation2 + $0x178] sm:$0xff]
        %v769 = vld [vmem:[#allocation2 + $0x180] sm:$0xff]
        %v770 = vld [vmem:[#allocation2 + $0x188] sm:$0xff]
        %v771 = vld [vmem:[#allocation2 + $0x190] sm:$0xff]
        %v772 = vld [vmem:[#allocation2 + $0x198] sm:$0xff]
        %v773 = vld [vmem:[#allocation2 + $0x1a0] sm:$0xff]
        %v774 = vld [vmem:[#allocation2 + $0x1a8] sm:$0xff]
        %v775 = vld [vmem:[#allocation2 + $0x1b0] sm:$0xff]
        %v776 = vld [vmem:[#allocation2 + $0x1b8] sm:$0xff]
        %v777 = vld [vmem:[#allocation2 + $0x1c0] sm:$0xff]
        %v778 = vld [vmem:[#allocation2 + $0x1c8] sm:$0xff]
        %v779 = vld [vmem:[#allocation2 + $0x1d0] sm:$0xff]
        %v780 = vld [vmem:[#allocation2 + $0x1d8] sm:$0xff]
        %v781 = vld [vmem:[#allocation2 + $0x1e0] sm:$0xff]
        %v782 = vld [vmem:[#allocation2 + $0x1e8] sm:$0xff]
        %v783 = vld [vmem:[#allocation2 + $0x1f0] sm:$0xff]
        %v784 = vld [vmem:[#allocation2 + $0x1f8] sm:$0xff]
        %v785 = vld [vmem:[%s7] sm:$0x3]
        %v787 = vlaneseq
        %v788 = vshrl.u32 %v787, 7
        %v789 = vsub.s32 0, %v788
        %v790 = vrot.slane %v785, %v789
        %v791 = vlaneseq
        %v792 = vshrl.u32 %v791, 7
        %v793 = vsub.s32 1, %v792
        %v794 = vrot.slane %v785, %v793
        %v861 = vunpack.c.l.b16 %v721
        %v862 = vunpack.c.h.b16 %v721
        %v863 = vunpack.c.l.b16 %v722
        %v864 = vunpack.c.h.b16 %v722
        %v865 = vunpack.c.l.b16 %v723
        %v866 = vunpack.c.h.b16 %v723
        %v867 = vunpack.c.l.b16 %v724
        %v868 = vunpack.c.h.b16 %v724
        %v869 = vunpack.c.l.b16 %v725
        %v870 = vunpack.c.h.b16 %v725
        %v871 = vunpack.c.l.b16 %v726
        %v872 = vunpack.c.h.b16 %v726
        %v873 = vunpack.c.l.b16 %v727
        %v874 = vunpack.c.h.b16 %v727
        %v875 = vunpack.c.l.b16 %v728
        %v876 = vunpack.c.h.b16 %v728
        %v877 = vunpack.c.l.b16 %v729
        %v878 = vunpack.c.h.b16 %v729
        %v879 = vunpack.c.l.b16 %v730
        %v880 = vunpack.c.h.b16 %v730
        %v881 = vunpack.c.l.b16 %v731
        %v882 = vunpack.c.h.b16 %v731
        %v883 = vunpack.c.l.b16 %v732
        %v884 = vunpack.c.h.b16 %v732
        %v885 = vunpack.c.l.b16 %v733
        %v886 = vunpack.c.h.b16 %v733
        %v887 = vunpack.c.l.b16 %v734
        %v888 = vunpack.c.h.b16 %v734
        %v889 = vunpack.c.l.b16 %v735
        %v890 = vunpack.c.h.b16 %v735
        %v891 = vunpack.c.l.b16 %v736
        %v892 = vunpack.c.h.b16 %v736
        %v893 = vunpack.c.l.b16 %v737
        %v894 = vunpack.c.h.b16 %v737
        %v895 = vunpack.c.l.b16 %v738
        %v896 = vunpack.c.h.b16 %v738
        %v897 = vunpack.c.l.b16 %v739
        %v898 = vunpack.c.h.b16 %v739
        %v899 = vunpack.c.l.b16 %v740
        %v900 = vunpack.c.h.b16 %v740
        %v901 = vunpack.c.l.b16 %v741
        %v902 = vunpack.c.h.b16 %v741
        %v903 = vunpack.c.l.b16 %v742
        %v904 = vunpack.c.h.b16 %v742
        %v905 = vunpack.c.l.b16 %v743
        %v906 = vunpack.c.h.b16 %v743
        %v907 = vunpack.c.l.b16 %v744
        %v908 = vunpack.c.h.b16 %v744
        %v909 = vunpack.c.l.b16 %v745
        %v910 = vunpack.c.h.b16 %v745
        %v911 = vunpack.c.l.b16 %v746
        %v912 = vunpack.c.h.b16 %v746
        %v913 = vunpack.c.l.b16 %v747
        %v914 = vunpack.c.h.b16 %v747
        %v915 = vunpack.c.l.b16 %v748
        %v916 = vunpack.c.h.b16 %v748
        %v917 = vunpack.c.l.b16 %v749
        %v918 = vunpack.c.h.b16 %v749
        %v919 = vunpack.c.l.b16 %v750
        %v920 = vunpack.c.h.b16 %v750
        %v921 = vunpack.c.l.b16 %v751
        %v922 = vunpack.c.h.b16 %v751
        %v923 = vunpack.c.l.b16 %v752
        %v924 = vunpack.c.h.b16 %v752
        %v925 = vunpack.c.l.b16 %v753
        %v926 = vunpack.c.h.b16 %v753
        %v927 = vunpack.c.l.b16 %v754
        %v928 = vunpack.c.h.b16 %v754
        %v929 = vunpack.c.l.b16 %v755
        %v930 = vunpack.c.h.b16 %v755
        %v931 = vunpack.c.l.b16 %v756
        %v932 = vunpack.c.h.b16 %v756
        %v933 = vunpack.c.l.b16 %v757
        %v934 = vunpack.c.h.b16 %v757
        %v935 = vunpack.c.l.b16 %v758
        %v936 = vunpack.c.h.b16 %v758
        %v937 = vunpack.c.l.b16 %v759
        %v938 = vunpack.c.h.b16 %v759
        %v939 = vunpack.c.l.b16 %v760
        %v940 = vunpack.c.h.b16 %v760
        %v941 = vunpack.c.l.b16 %v761
        %v942 = vunpack.c.h.b16 %v761
        %v943 = vunpack.c.l.b16 %v762
        %v944 = vunpack.c.h.b16 %v762
        %v945 = vunpack.c.l.b16 %v763
        %v946 = vunpack.c.h.b16 %v763
        %v947 = vunpack.c.l.b16 %v764
        %v948 = vunpack.c.h.b16 %v764
        %v949 = vunpack.c.l.b16 %v765
        %v950 = vunpack.c.h.b16 %v765
        %v951 = vunpack.c.l.b16 %v766
        %v952 = vunpack.c.h.b16 %v766
        %v953 = vunpack.c.l.b16 %v767
        %v954 = vunpack.c.h.b16 %v767
        %v955 = vunpack.c.l.b16 %v768
        %v956 = vunpack.c.h.b16 %v768
        %v957 = vunpack.c.l.b16 %v769
        %v958 = vunpack.c.h.b16 %v769
        %v959 = vunpack.c.l.b16 %v770
        %v960 = vunpack.c.h.b16 %v770
        %v961 = vunpack.c.l.b16 %v771
        %v962 = vunpack.c.h.b16 %v771
        %v963 = vunpack.c.l.b16 %v772
        %v964 = vunpack.c.h.b16 %v772
        %v965 = vunpack.c.l.b16 %v773
        %v966 = vunpack.c.h.b16 %v773
        %v967 = vunpack.c.l.b16 %v774
        %v968 = vunpack.c.h.b16 %v774
        %v969 = vunpack.c.l.b16 %v775
        %v970 = vunpack.c.h.b16 %v775
        %v971 = vunpack.c.l.b16 %v776
        %v972 = vunpack.c.h.b16 %v776
        %v973 = vunpack.c.l.b16 %v777
        %v974 = vunpack.c.h.b16 %v777
        %v975 = vunpack.c.l.b16 %v778
        %v976 = vunpack.c.h.b16 %v778
        %v977 = vunpack.c.l.b16 %v779
        %v978 = vunpack.c.h.b16 %v779
        %v979 = vunpack.c.l.b16 %v780
        %v980 = vunpack.c.h.b16 %v780
        %v981 = vunpack.c.l.b16 %v781
        %v982 = vunpack.c.h.b16 %v781
        %v983 = vunpack.c.l.b16 %v782
        %v984 = vunpack.c.h.b16 %v782
        %v985 = vunpack.c.l.b16 %v783
        %v986 = vunpack.c.h.b16 %v783
        %v987 = vunpack.c.l.b16 %v784
        %v988 = vunpack.c.h.b16 %v784
        %v989 = vpack.c.b16 %v863, %v861
        %v990 = vpack.c.b16 %v864, %v862
        %v991 = vpack.c.b16 %v867, %v865
        %v992 = vpack.c.b16 %v868, %v866
        %v993 = vpack.c.b16 %v871, %v869
        %v994 = vpack.c.b16 %v872, %v870
        %v995 = vpack.c.b16 %v875, %v873
        %v996 = vpack.c.b16 %v876, %v874
        %v997 = vpack.c.b16 %v879, %v877
        %v998 = vpack.c.b16 %v880, %v878
        %v999 = vpack.c.b16 %v883, %v881
        %v1000 = vpack.c.b16 %v884, %v882
        %v1001 = vpack.c.b16 %v887, %v885
        %v1002 = vpack.c.b16 %v888, %v886
        %v1003 = vpack.c.b16 %v891, %v889
        %v1004 = vpack.c.b16 %v892, %v890
        %v1005 = vpack.c.b16 %v895, %v893
        %v1006 = vpack.c.b16 %v896, %v894
        %v1007 = vpack.c.b16 %v899, %v897
        %v1008 = vpack.c.b16 %v900, %v898
        %v1009 = vpack.c.b16 %v903, %v901
        %v1010 = vpack.c.b16 %v904, %v902
        %v1011 = vpack.c.b16 %v907, %v905
        %v1012 = vpack.c.b16 %v908, %v906
        %v1013 = vpack.c.b16 %v911, %v909
        %v1014 = vpack.c.b16 %v912, %v910
        %v1015 = vpack.c.b16 %v915, %v913
        %v1016 = vpack.c.b16 %v916, %v914
        %v1017 = vpack.c.b16 %v919, %v917
        %v1018 = vpack.c.b16 %v920, %v918
        %v1019 = vpack.c.b16 %v923, %v921
        %v1020 = vpack.c.b16 %v924, %v922
        %v1021 = vpack.c.b16 %v927, %v925
        %v1022 = vpack.c.b16 %v928, %v926
        %v1023 = vpack.c.b16 %v931, %v929
        %v1024 = vpack.c.b16 %v932, %v930
        %v1025 = vpack.c.b16 %v935, %v933
        %v1026 = vpack.c.b16 %v936, %v934
        %v1027 = vpack.c.b16 %v939, %v937
        %v1028 = vpack.c.b16 %v940, %v938
        %v1029 = vpack.c.b16 %v943, %v941
        %v1030 = vpack.c.b16 %v944, %v942
        %v1031 = vpack.c.b16 %v947, %v945
        %v1032 = vpack.c.b16 %v948, %v946
        %v1033 = vpack.c.b16 %v951, %v949
        %v1034 = vpack.c.b16 %v952, %v950
        %v1035 = vpack.c.b16 %v955, %v953
        %v1036 = vpack.c.b16 %v956, %v954
        %v1037 = vpack.c.b16 %v959, %v957
        %v1038 = vpack.c.b16 %v960, %v958
        %v1039 = vpack.c.b16 %v963, %v961
        %v1040 = vpack.c.b16 %v964, %v962
        %v1041 = vpack.c.b16 %v967, %v965
        %v1042 = vpack.c.b16 %v968, %v966
        %v1043 = vpack.c.b16 %v971, %v969
        %v1044 = vpack.c.b16 %v972, %v970
        %v1045 = vpack.c.b16 %v975, %v973
        %v1046 = vpack.c.b16 %v976, %v974
        %v1047 = vpack.c.b16 %v979, %v977
        %v1048 = vpack.c.b16 %v980, %v978
        %v1049 = vpack.c.b16 %v983, %v981
        %v1050 = vpack.c.b16 %v984, %v982
        %v1051 = vpack.c.b16 %v987, %v985
        %v1052 = vpack.c.b16 %v988, %v986
        %1117 = vmatprep.subr.bf16.mxu0 %v990
        %1118 = vmatpush1.bf16.msra.mxu0 %v989
        %1119 = vmatprep.subr.bf16.mxu0 %v992
        %1120 = vmatpush1.bf16.msra.mxu0 %v991
        %1121 = vmatprep.subr.bf16.mxu0 %v994
        %1122 = vmatpush1.bf16.msra.mxu0 %v993
        %1123 = vmatprep.subr.bf16.mxu0 %v996
        %1124 = vmatpush1.bf16.msra.mxu0 %v995
        %1125 = vmatprep.subr.bf16.mxu0 %v998
        %1126 = vmatpush1.bf16.msra.mxu0 %v997
        %1127 = vmatprep.subr.bf16.mxu0 %v1000
        %1128 = vmatpush1.bf16.msra.mxu0 %v999
        %1129 = vmatprep.subr.bf16.mxu0 %v1002
        %1130 = vmatpush1.bf16.msra.mxu0 %v1001
        %1131 = vmatprep.subr.bf16.mxu0 %v1004
        %1132 = vmatpush1.bf16.msra.mxu0 %v1003
        %1133 = vmatprep.subr.bf16.mxu0 %v1006
        %1134 = vmatpush1.bf16.msra.mxu0 %v1005
        %1135 = vmatprep.subr.bf16.mxu0 %v1008
        %1136 = vmatpush1.bf16.msra.mxu0 %v1007
        %1137 = vmatprep.subr.bf16.mxu0 %v1010
        %1138 = vmatpush1.bf16.msra.mxu0 %v1009
        %1139 = vmatprep.subr.bf16.mxu0 %v1012
        %1140 = vmatpush1.bf16.msra.mxu0 %v1011
        %1141 = vmatprep.subr.bf16.mxu0 %v1014
        %1142 = vmatpush1.bf16.msra.mxu0 %v1013
        %1143 = vmatprep.subr.bf16.mxu0 %v1016
        %1144 = vmatpush1.bf16.msra.mxu0 %v1015
        %1145 = vmatprep.subr.bf16.mxu0 %v1018
        %1146 = vmatpush1.bf16.msra.mxu0 %v1017
        %1147 = vmatprep.subr.bf16.mxu0 %v1020
        %1148 = vmatpush1.bf16.msra.mxu0 %v1019
        %1149 = vmatprep.mubr.bf16.mxu0 %v718
        %1150 = vmatmul.mubr.bf16.gmra.mrb[0].mxu0 %v717
        %v1151 = vpop.f32.mrb[0].mxu0
        %v1152 = vadd.f32 %v790, %v1151
        %v1153 = vpop.f32.mrb[0].mxu0
        %v1154 = vadd.f32 %v794, %v1153
        %v1155 = vpop.f32.mrb[0].mxu0
        %v1156 = vpop.f32.mrb[0].mxu0
        %1157 = vdwg.mxu0
        %1158 = vmatprep.subr.bf16.mxu0 %v1022
        %1159 = vmatpush1.bf16.msra.mxu0 %v1021
        %1160 = vmatprep.subr.bf16.mxu0 %v1024
        %1161 = vmatpush1.bf16.msra.mxu0 %v1023
        %1162 = vmatprep.subr.bf16.mxu0 %v1026
        %1163 = vmatpush1.bf16.msra.mxu0 %v1025
        %1164 = vmatprep.subr.bf16.mxu0 %v1028
        %1165 = vmatpush1.bf16.msra.mxu0 %v1027
        %1166 = vmatprep.subr.bf16.mxu0 %v1030
        %1167 = vmatpush1.bf16.msra.mxu0 %v1029
        %1168 = vmatprep.subr.bf16.mxu0 %v1032
        %1169 = vmatpush1.bf16.msra.mxu0 %v1031
        %1170 = vmatprep.subr.bf16.mxu0 %v1034
        %1171 = vmatpush1.bf16.msra.mxu0 %v1033
        %1172 = vmatprep.subr.bf16.mxu0 %v1036
        %1173 = vmatpush1.bf16.msra.mxu0 %v1035
        %1174 = vmatprep.subr.bf16.mxu0 %v1038
        %1175 = vmatpush1.bf16.msra.mxu0 %v1037
        %1176 = vmatprep.subr.bf16.mxu0 %v1040
        %1177 = vmatpush1.bf16.msra.mxu0 %v1039
        %1178 = vmatprep.subr.bf16.mxu0 %v1042
        %1179 = vmatpush1.bf16.msra.mxu0 %v1041
        %1180 = vmatprep.subr.bf16.mxu0 %v1044
        %1181 = vmatpush1.bf16.msra.mxu0 %v1043
        %1182 = vmatprep.subr.bf16.mxu0 %v1046
        %1183 = vmatpush1.bf16.msra.mxu0 %v1045
        %1184 = vmatprep.subr.bf16.mxu0 %v1048
        %1185 = vmatpush1.bf16.msra.mxu0 %v1047
        %1186 = vmatprep.subr.bf16.mxu0 %v1050
        %1187 = vmatpush1.bf16.msra.mxu0 %v1049
        %1188 = vmatprep.subr.bf16.mxu0 %v1052
        %1189 = vmatpush1.bf16.msra.mxu0 %v1051
        %1190 = vmatprep.mubr.bf16.mxu0 %v720
        %1191 = vmatmul.mubr.bf16.gmra.mrb[0].mxu0 %v719
        %v1192 = vpop.f32.mrb[0].mxu0
        %v1193 = vadd.f32 %v1152, %v1192
        %v1194 = vpop.f32.mrb[0].mxu0
        %v1195 = vadd.f32 %v1154, %v1194
        %v1196 = vpop.f32.mrb[0].mxu0
        %v1197 = vpop.f32.mrb[0].mxu0
        %1198 = vdwg.mxu0
        %v1199 = vxor.u32 %v1195, 2147483648
        %v1200 = vmul.f32 %v1199, 1.442695
        %v1201 = vpow.pop %v1200
        %v1202 = vadd.f32 %v1201, 1.0
        %v1203 = vrcp.pop %v1202
        %v1204 = vmul.f32 1.0, %v1203
        %v1205 = vmul.f32 %v1193, %v1204
        %1206 = vst [vmem:[%s349] sm:$0xff] %v1205
        %p1207 = scmp.lt.s32.totalorder %s20, 1
        %s1208 = scalar_select %p1207, %s20, 1
        %s1209 = smul.addr %s1208, 8
        %s1210 = scalar_lea.vmem %s8, %s1209
        // Predicated region
        $region57: #{separator_forward.1} parent=51 // pred_check
          %p1211 = pneg %p221
        $region58: #{separator_forward.1} parent=51 // pred_check_branch
          %1213 = sbr.rel (%p1211) target = $region60
        $region59: #{separator_forward.1} parent=51 // pred_region
          _
        $region60: #{separator_forward.1} parent=51 // pred_fallthru
          _
      $region52: #{separator_forward.1} parent=5 // pred_fallthru
        _
      %p1214 = scmp.le.s32.totalorder 2, %s15
      // Predicated region
      $region61: #{separator_forward.1} parent=5 // pred_check
        %p1215 = pneg %p1214
      $region62: #{separator_forward.1} parent=5 // pred_check_branch
        %1217 = sbr.rel (%p1215) target = $region64
      $region63: #{separator_forward.1} parent=5 // pred_region
        %s1218 = ssub.s32 %s15, 2
        // Predicated region
        $region65: #{separator_forward.1} parent=63 // pred_check
          %p1219 = pneg %p227
        $region66: #{separator_forward.1} parent=63 // pred_check_branch
          %1221 = sbr.rel (%p1219) target = $region68
        $region67: #{separator_forward.1} parent=63 // pred_region
          %p1222 = scmp.lt.s32.totalorder %s21, 1
          %s1223 = scalar_select %p1222, %s21, 1
          %s1224 = smul.addr %s1223, 8
          %s1225 = scalar_lea.vmem %s8, %s1224
        $region68: #{separator_forward.1} parent=63 // pred_fallthru
          _
      $region64: #{separator_forward.1} parent=5 // pred_fallthru
        _
    $region6: #{separator_forward.1} parent=1 // loop_footer
      %s19 = sadd.s32 1, %s15
    $region7: #{separator_forward.1} parent=1 // loop_footer_branch
      %14 = sbr.rel target = $region3
    $region8: #{separator_forward.1} parent=1 // loop_exit
      _
    %1226 = vsyncpa [#allocation3], 1
    %s1227 = scalar_lea.sflag [#allocation3], 1
    %1228 = vsyncpa %s1227, 1

</llo_original>
